<compile_context>
chip_gen: v6e
topology: v6e:2x2x1
jax: 0.10.0
libtpu: 0.0.40
codegen_flags: <defaults>
</compile_context>

<pallas_src>
import functools

import jax
import jax.numpy as jnp
from jax.experimental import pallas as pl
from jax.experimental.pallas import tpu as pltpu


def _round_up(a: int, b: int) -> int:
    return (a + b - 1) // b * b


def _pick_tile_m(M: int, max_tile: int) -> int:
    """Pick an M tile: avoid padding M (prefer divisors of M) and prefer
    multiples of 16 (bf16 sublane packing)."""
    if M <= max_tile:
        return M                       # single full-dim block: no padding needed
    for align in (16, 8):
        t = (max_tile // align) * align
        while t >= 128:
            if M % t == 0:
                return t
            t -= align
    # No usable divisor: fall back to a padded last tile.
    # TODO(synk): a clamped index_map + masked store would avoid padding the
    # whole activation matrix in this (rare) ragged case.
    return max(16, (max_tile // 16) * 16)


def _patch_embed_kernel(p_ref, w_ref, b_ref, o_ref):
    # p_ref: (tile_m, K) bf16, w_ref: (K, Ep) bf16 (resident, single-buffered),
    # b_ref: (1, Ep) f32, o_ref: (tile_m, Ep) out dtype (bf16 by default).
    acc = jnp.dot(p_ref[...], w_ref[...], preferred_element_type=jnp.float32)
    o_ref[...] = (acc + b_ref[...]).astype(o_ref.dtype)


def patch_embed_forward(x, weight, bias, patch_size, *, tile_m=None,
                        out_dtype=jnp.bfloat16):
    """Forward of PatchEmbed.

    x:      (B, C, H, W) NCHW (PyTorch layout).
    weight: (E, C, P, P)  Conv2d weight (OIHW).
    bias:   (E,)
    returns (B, num_patches, E) == proj(x).flatten(2).transpose(1, 2),
    computed with bf16 operands / f32 accumulation; out_dtype defaults to
    bf16 to halve output HBM traffic (pass jnp.float32 for an f32 result).
    """
    B, C, H, W = x.shape
    E = weight.shape[0]
    P = patch_size
    assert H % P == 0 and W % P == 0
    gh, gw = H // P, W // P
    num_patches = gh * gw
    K = C * P * P
    M = B * num_patches

    # ---- operand prep (layout-only, no FLOPs) -------------------------------
    # Cast to bf16 first so the patchify rearrangement moves half the bytes.
    # With allow_input_fusion on this operand, XLA may fuse this whole producer
    # chain into the pallas_call input instead of writing `patches` to HBM.
    # TODO(synk): the bigger win (gridding over patch-rows and doing the
    # (c,ph,pw) rearrangement in-kernel on the idle XLU) needs an in-kernel 5-D
    # transpose that is not robust under Mosaic lowering for small C/P.
    xb = x.astype(jnp.bfloat16)
    patches = xb.reshape(B, C, gh, P, gw, P)
    patches = patches.transpose(0, 2, 4, 1, 3, 5)      # (B, gh, gw, C, P, P)
    patches = patches.reshape(M, K)

    # Conv weight (E, C, P, P) -> GEMM weight (K, E); (c, ph, pw) order matches.
    w_mat = weight.reshape(E, K).T.astype(jnp.bfloat16)
    b_row = bias.reshape(1, E).astype(jnp.float32)

    # ---- padding policy ------------------------------------------------------
    # Never pad K: a full-dim block is legal and padding would cost an extra
    # HBM pass over activations.  Pad E (weight/bias/output lanes) only when
    # E % 128 != 0 (standard ViT dims are already lane-aligned).
    Ep = E if E % 128 == 0 else _round_up(E, 128)
    if Ep != E:
        w_mat = jnp.pad(w_mat, ((0, 0), (0, Ep - E)))
        b_row = jnp.pad(b_row, ((0, 0), (0, Ep - E)))

    # ---- generation-aware VMEM budget & tile size ----------------------------
    try:
        vmem_cap = int(pltpu.get_tpu_info().vmem_capacity_bytes)
    except Exception:  # pragma: no cover - conservative fallback
        vmem_cap = 64 * 1024 * 1024
    # v5e/v6e: 128 MiB physical -> allow up to ~100 MiB scoped.
    # v7x: 64 MiB per TC -> cap at ~56 MiB (each TC holds its own weight copy).
    vmem_cap_limit = (100 * 1024 * 1024 if vmem_cap >= 100 * 1024 * 1024
                      else 56 * 1024 * 1024)

    out_b = jnp.dtype(out_dtype).itemsize
    in_b = 2                                        # bf16 patches / weight
    fixed = K * Ep * in_b + 8 * Ep * 4              # single-buffered weight + bias
    per_row = 2 * K * in_b + 2 * Ep * out_b         # dbl-buffered in + out tile
    budget = int(0.6 * vmem_cap_limit) - fixed      # keep >=40% headroom
    max_tile = max(256, min(2048, budget // max(per_row, 1)))

    if tile_m is None:
        tile_m = _pick_tile_m(M, max_tile)
    else:
        tile_m = _round_up(min(int(tile_m), M), 8)

    Mp = _round_up(M, tile_m)
    if Mp != M:
        patches = jnp.pad(patches, ((0, Mp - M), (0, 0)))
    grid_m = Mp // tile_m

    vmem_need = per_row * tile_m + fixed
    vmem_limit = int(min(max(2 * vmem_need, 32 * 1024 * 1024), vmem_cap_limit))

    cost = pl.CostEstimate(
        flops=2 * Mp * K * Ep,
        transcendentals=0,
        bytes_accessed=Mp * K * in_b + K * Ep * in_b + Mp * Ep * out_b,
    )

    out = pl.pallas_call(
        _patch_embed_kernel,
        out_shape=jax.ShapeDtypeStruct((Mp, Ep), out_dtype),
        grid_spec=pltpu.PrefetchScalarGridSpec(
            num_scalar_prefetch=0,
            grid=(grid_m,),
            in_specs=[
                # patches: one M tile per grid step, full K (no padding).
                pl.BlockSpec((tile_m, K), lambda i: (i, 0)),
                # weight / bias: grid-invariant -> resident, single-buffered.
                pl.BlockSpec((K, Ep), lambda i: (0, 0),
                             pipeline_mode=pl.Buffered(1)),
                pl.BlockSpec((1, Ep), lambda i: (0, 0),
                             pipeline_mode=pl.Buffered(1)),
            ],
            out_specs=pl.BlockSpec((tile_m, Ep), lambda i: (i, 0)),
        ),
        compiler_params=pltpu.CompilerParams(
            dimension_semantics=("parallel",),
            vmem_limit_bytes=vmem_limit,
            # Let XLA fuse the cast/reshape/transpose producer of `patches`
            # into the kernel operand (removes a full HBM pass over activations).
            allow_input_fusion=[True, False, False],
        ),
        cost_estimate=cost,
    )(patches, w_mat, b_row)

    if Mp != M or Ep != E:
        out = out[:M, :E]
    return out.reshape(B, num_patches, E)


if __name__ == "__main__":
    # Small shapes consistent with the module: img=16, patch=4, in_chans=4, embed_dim=32
    B, C, H, W = 2, 4, 16, 16
    P = 4
    E = 32

    key = jax.random.PRNGKey(0)
    kx, kw, kb = jax.random.split(key, 3)
    x = jax.random.normal(kx, (B, C, H, W), dtype=jnp.float32)
    weight = jax.random.normal(kw, (E, C, P, P), dtype=jnp.float32) * 0.02
    bias = jax.random.normal(kb, (E,), dtype=jnp.float32) * 0.02

    fwd = jax.jit(functools.partial(patch_embed_forward, patch_size=P))
    out = jax.block_until_ready(fwd(x, weight, bias))

    # Reference (f32): XLA conv (NCHW, stride=P) + flatten(2).transpose(1, 2)
    ref = jax.lax.conv_general_dilated(
        x, weight, window_strides=(P, P), padding="VALID",
        dimension_numbers=("NCHW", "OIHW", "NCHW"),
    ) + bias.reshape(1, E, 1, 1)
    ref = ref.reshape(B, E, -1).transpose(0, 2, 1)

    assert out.shape == (B, (H // P) * (W // P), E)
    assert out.dtype == jnp.bfloat16
    # bf16 operands / bf16 output vs f32 reference -> loose tolerance.
    err = float(jnp.max(jnp.abs(out.astype(jnp.float32) - ref)))
    assert err < 3e-2, err
    print("KERNEL_OK")
</pallas_src>

<mosaic_0001>
module attributes {stable_mosaic.version = 11 : i64} {
  func.func @_patch_embed_kernel(%arg0: i32, %arg1: memref<32x64xbf16, #tpu.memory_space<vmem>>, %arg2: memref<64x128xbf16, #tpu.memory_space<vmem>>, %arg3: memref<1x128xf32, #tpu.memory_space<vmem>>, %arg4: memref<32x128xbf16, #tpu.memory_space<vmem>>) attributes {dimension_semantics = [#tpu.dimension_semantics<parallel>], iteration_bounds = array<i64: 1>, scalar_prefetch = 0 : i64, scratch_operands = 0 : i64, tpu.core_type = #tpu.core_type<tc>, window_params = [{transform_indices = @transform_0, window_bounds = array<i64: 32, 64>}, {pipeline_mode = #tpu.pipeline_mode<synchronous>, transform_indices = @transform_1, window_bounds = array<i64: 64, 128>}, {pipeline_mode = #tpu.pipeline_mode<synchronous>, transform_indices = @transform_2, window_bounds = array<i64: 1, 128>}, {transform_indices = @transform_3, window_bounds = array<i64: 32, 128>}]} {
    %c0 = arith.constant 0 : index
    %c0_0 = arith.constant 0 : index
    %0 = vector.load %arg1[%c0, %c0_0] : memref<32x64xbf16, #tpu.memory_space<vmem>>, vector<32x64xbf16>
    %c0_1 = arith.constant 0 : index
    %c0_2 = arith.constant 0 : index
    %1 = vector.load %arg2[%c0_1, %c0_2] : memref<64x128xbf16, #tpu.memory_space<vmem>>, vector<64x128xbf16>
    %cst = arith.constant dense<0.000000e+00> : vector<32x128xf32>
    %2 = tpu.matmul %0, %1, %cst {dimension_numbers = #tpu.dot_dimension_numbers<[1], [0], [0], [1], [0, 0, 1, 1], [], []>} : vector<32x64xbf16>, vector<64x128xbf16>, vector<32x128xf32> -> vector<32x128xf32>
    %c0_3 = arith.constant 0 : index
    %c0_4 = arith.constant 0 : index
    %3 = vector.load %arg3[%c0_3, %c0_4] : memref<1x128xf32, #tpu.memory_space<vmem>>, vector<1x128xf32>
    %4 = vector.broadcast %3 : vector<1x128xf32> to vector<32x128xf32>
    %5 = arith.addf %2, %4 : vector<32x128xf32>
    %6 = arith.truncf %5 : vector<32x128xf32> to vector<32x128xbf16>
    %c0_5 = arith.constant 0 : index
    %c0_6 = arith.constant 0 : index
    %7 = vector.load %arg4[%c0_5, %c0_6] : memref<32x128xbf16, #tpu.memory_space<vmem>>, vector<32x128xbf16>
    tpu.vector_store %arg4[%c0_5, %c0_6], %6 {strides = array<i32>} : memref<32x128xbf16, #tpu.memory_space<vmem>>, vector<32x128xbf16>,
    return
  }
  func.func @transform_0(%arg0: i32) -> (i32, i32) {
    %c0_i32 = arith.constant 0 : i32
    %c0_i32_0 = arith.constant 0 : i32
    return %arg0, %c0_i32 : i32, i32
  }
  func.func @transform_1(%arg0: i32) -> (i32, i32) {
    %c0_i32 = arith.constant 0 : i32
    %c0_i32_0 = arith.constant 0 : i32
    %c0_i32_1 = arith.constant 0 : i32
    return %c0_i32, %c0_i32_0 : i32, i32
  }
  func.func @transform_2(%arg0: i32) -> (i32, i32) {
    %c0_i32 = arith.constant 0 : i32
    %c0_i32_0 = arith.constant 0 : i32
    %c0_i32_1 = arith.constant 0 : i32
    return %c0_i32, %c0_i32_0 : i32, i32
  }
  func.func @transform_3(%arg0: i32) -> (i32, i32) {
    %c0_i32 = arith.constant 0 : i32
    %c0_i32_0 = arith.constant 0 : i32
    return %arg0, %c0_i32 : i32, i32
  }
}

</mosaic_0001>

<llo_original>
// kernel: patch_embed_forward.1
$region0: #{patch_embed_forward.1}
  #allocation0 [shape = 'u32[]', space=smem, size = 0x4, offset = 0x4, fixed_abs, tag = 'smem constant byte address 0x4 - core index']
  #allocation1 [shape = 'u32[144,128]{1,0:T(1,128)}', space=vmem, size = 0x12000, scoped, tag = 'internal scratch']
  %s0 = inlined_call_operand.vmem [shape: bf16[32,64], index: 0, kind: input, shape index: {}]
  %s1 = inlined_call_operand.vmem [shape: bf16[64,128], index: 1, kind: input, shape index: {}]
  %s2 = inlined_call_operand.vmem [shape: f32[1,128], index: 2, kind: input, shape index: {}]
  %s3 = inlined_call_operand.hbm [shape: bf16[32,128], index: 3, kind: output, shape index: {}]
  %s4 = sld [smem:[#allocation0]]
  $region22: #{patch_embed_forward.1} parent=0
    _
  %s6 = ssub.s32 1, %s4
  %s7 = scalar_select 0, %s6, %s4
  $region1: #{patch_embed_forward.1} parent=0
    #allocation2 [shape = 'u8[8192]{0}', space=vmem, size = 0x2000, scoped, tag = 'output window, operand 0, single buffered']
    #allocation3 [shape = 's32[1]{0}', space=sflag, size = 0x4, scoped, tag = 'scoped memory for patch_embed_forward.1']
    %8 = vsyncpa [#allocation3], 0
    // Predicated region
    $region2: #{patch_embed_forward.1} parent=1 // pred_check
      _
    $region3: #{patch_embed_forward.1} parent=1 // pred_check_branch
      %10 = sbr.rel (0) target = $region5
    $region4: #{patch_embed_forward.1} parent=1 // pred_region
      _
    $region5: #{patch_embed_forward.1} parent=1 // pred_fallthru
      _
    // Predicated region
    $region6: #{patch_embed_forward.1} parent=1 // pred_check
      _
    $region7: #{patch_embed_forward.1} parent=1 // pred_check_branch
      %12 = sbr.rel (0) target = $region9
    $region8: #{patch_embed_forward.1} parent=1 // pred_region
      _
    $region9: #{patch_embed_forward.1} parent=1 // pred_fallthru
      _
    // Predicated region
    $region10: #{patch_embed_forward.1} parent=1 // pred_check
      _
    $region11: #{patch_embed_forward.1} parent=1 // pred_check_branch
      %14 = sbr.rel (0) target = $region13
    $region12: #{patch_embed_forward.1} parent=1 // pred_region
      _
    $region13: #{patch_embed_forward.1} parent=1 // pred_fallthru
      _
    %v16 = vld [vmem:[%s0] sm:$0xf]
    %v17 = vld [vmem:[%s0 + $0x4] sm:$0xf]
    %v18 = vld [vmem:[%s0 + $0x8] sm:$0xf]
    %v19 = vld [vmem:[%s0 + $0xc] sm:$0xf]
    %v20 = vld [vmem:[%s1] sm:$0xf]
    %v21 = vld [vmem:[%s1 + $0x4] sm:$0xf]
    %v22 = vld [vmem:[%s1 + $0x8] sm:$0xf]
    %v23 = vld [vmem:[%s1 + $0xc] sm:$0xf]
    %v24 = vld [vmem:[%s1 + $0x10] sm:$0xf]
    %v25 = vld [vmem:[%s1 + $0x14] sm:$0xf]
    %v26 = vld [vmem:[%s1 + $0x18] sm:$0xf]
    %v27 = vld [vmem:[%s1 + $0x1c] sm:$0xf]
    %v28 = vld [vmem:[%s2] sm:$0x1]
    %v30 = vlaneseq
    %v31 = vshrl.u32 %v30, 7
    %v32 = vsub.s32 0, %v31
    %v33 = vrot.slane %v28, %v32
    %v39 = vunpack.c.l.b16 %v16
    %v40 = vunpack.c.l.b16 %v17
    %v41 = vunpack.c.l.b16 %v18
    %v42 = vunpack.c.l.b16 %v19
    %v43 = vpack.c.b16 %v40, %v39
    %v44 = vpack.c.b16 %v42, %v41
    %v53 = vunpack.c.l.b16 %v20
    %v54 = vunpack.c.l.b16 %v21
    %v55 = vunpack.c.l.b16 %v22
    %v56 = vunpack.c.l.b16 %v23
    %v57 = vunpack.c.l.b16 %v24
    %v58 = vunpack.c.l.b16 %v25
    %v59 = vunpack.c.l.b16 %v26
    %v60 = vunpack.c.l.b16 %v27
    %v61 = vpack.c.b16 %v54, %v53
    %v62 = vpack.c.b16 %v56, %v55
    %v63 = vpack.c.b16 %v58, %v57
    %v64 = vpack.c.b16 %v60, %v59
    %vm69 = vcmask 523264
    %v71 = vsel %vm69, %v43, 0
    %v74 = vsel %vm69, %v44, 0
    %76 = vmatprep.subr.bf16.mxu0 0
    %77 = vmatpush1.bf16.msra.mxu0 0
    %78 = vmatprep.subr.bf16.mxu0 0
    %79 = vmatpush1.bf16.msra.mxu0 0
    %80 = vmatprep.subr.bf16.mxu0 0
    %81 = vmatpush1.bf16.msra.mxu0 0
    %82 = vmatprep.subr.bf16.mxu0 0
    %83 = vmatpush1.bf16.msra.mxu0 0
    %84 = vmatprep.subr.bf16.mxu0 0
    %85 = vmatpush1.bf16.msra.mxu0 %v64
    %86 = vmatprep.subr.bf16.mxu0 0
    %87 = vmatpush1.bf16.msra.mxu0 %v63
    %88 = vmatprep.subr.bf16.mxu0 0
    %89 = vmatpush1.bf16.msra.mxu0 %v62
    %90 = vmatprep.subr.bf16.mxu0 0
    %91 = vmatpush1.bf16.msra.mxu0 %v61
    %92 = vmatprep.subr.bf16.mxu0 0
    %93 = vmatpush2.bf16.msra.mxu0 0
    %94 = vmatprep.subr.bf16.mxu0 0
    %95 = vmatpush2.bf16.msra.mxu0 0
    %96 = vmatprep.subr.bf16.mxu0 0
    %97 = vmatpush2.bf16.msra.mxu0 0
    %98 = vmatprep.subr.bf16.mxu0 0
    %99 = vmatpush2.bf16.msra.mxu0 0
    %100 = vmatprep.subr.bf16.mxu0 0
    %101 = vmatpush2.bf16.msra.mxu0 0
    %102 = vmatprep.subr.bf16.mxu0 0
    %103 = vmatpush2.bf16.msra.mxu0 0
    %104 = vmatprep.subr.bf16.mxu0 0
    %105 = vmatpush2.bf16.msra.mxu0 0
    %106 = vmatprep.subr.bf16.mxu0 0
    %107 = vmatpush2.bf16.msra.mxu0 0
    %108 = vmatprep.mubr.bf16.mxu0 0
    %109 = vmatmul.mubr.bf16.gmra.mxu0 %v71
    %v110 = vpop.f32.mrf.mxu0
    %v111 = vadd.f32 %v33, %v110
    %v112 = vpop.f32.mrf.mxu0
    %v113 = vpop.f32.mrf.mxu0
    %v114 = vadd.f32 %v33, %v113
    %v115 = vpop.f32.mrf.mxu0
    %116 = vmatprep.mubr.bf16.mxu0 0
    %117 = vmatmul.mubr.bf16.gmra.mxu0 %v74
    %v118 = vpop.f32.mrf.mxu0
    %v119 = vadd.f32 %v33, %v118
    %v120 = vpop.f32.mrf.mxu0
    %v121 = vpop.f32.mrf.mxu0
    %v122 = vadd.f32 %v33, %v121
    %v123 = vpop.f32.mrf.mxu0
    %124 = vdwg.mxu0
    %v125 = vpack.c.bf16 %v114, %v111
    %v126 = vpack.c.bf16 %v122, %v119
    %v129 = vunpack.c.l.b16 %v125
    %v130 = vunpack.c.h.b16 %v125
    %v131 = vunpack.c.l.b16 %v126
    %v132 = vunpack.c.h.b16 %v126
    %v133 = vpack.c.b16 %v129, %v129
    %v134 = vpack.c.b16 %v130, %v130
    %v135 = vpack.c.b16 %v131, %v131
    %v136 = vpack.c.b16 %v132, %v132
    %141 = vst [vmem:[#allocation2] sm:$0xf] %v133
    %142 = vst [vmem:[#allocation2 + $0x4] sm:$0xf] %v134
    %143 = vst [vmem:[#allocation2 + $0x8] sm:$0xf] %v135
    %144 = vst [vmem:[#allocation2 + $0xc] sm:$0xf] %v136
    // Predicated region
    $region14: #{patch_embed_forward.1} parent=1 // pred_check
      _
    $region15: #{patch_embed_forward.1} parent=1 // pred_check_branch
      %146 = sbr.rel (0) target = $region17
    $region16: #{patch_embed_forward.1} parent=1 // pred_region
      %s148 = ssub.s32 256, 256
      %149 = vsyncadd [#allocation3], %s148
      %s150 = sshll.u32 [#allocation2], 4
      %s151 = int_to_ptr.vmem [resolvable:$true] %s150
      %156 = dma.vmem_to_hbm [thread:$0]  %s151, 256, %s3, [#allocation3], 64, 64, 4
    $region17: #{patch_embed_forward.1} parent=1 // pred_fallthru
      _
    // Predicated region
    $region18: #{patch_embed_forward.1} parent=1 // pred_check
      _
    $region19: #{patch_embed_forward.1} parent=1 // pred_check_branch
      %158 = sbr.rel (0) target = $region21
    $region20: #{patch_embed_forward.1} parent=1 // pred_region
      %159 = dma.done [#allocation3], 256
    $region21: #{patch_embed_forward.1} parent=1 // pred_fallthru
      _
    %160 = vsyncpa [#allocation3], 1

</llo_original>
